<compile_context>
chip_gen: v5e
topology: v5e:2x2
jax: 0.10.0
libtpu: 0.0.40
codegen_flags: <defaults>
</compile_context>

<pallas_src>
import functools

import jax
import jax.numpy as jnp
from jax.experimental import pallas as pl
from jax.experimental.pallas import tpu as pltpu

INPUT_DIM = 256
HIDDEN = 128
NUM_CLASSES = 5
PAD_MXU = 128      # fc2 matmul width inside the kernel (lane-dense MXU)
PAD_CLS = 8        # fc2 HBM writeback width (classes padded 5 -> 8)
DEFAULT_TB = 2048  # batch tile (bf16 inputs: ~2 MiB/tile, double-buffered ~4 MiB)


def _round_up(n, m):
    return ((n + m - 1) // m) * m


def emotion_cls_kernel(x_ref, w1_ref, b1_ref, w2_ref, b2_ref, x1_ref, x2_ref):
    # fc1: [TB,256] @ [256,128] + b1, f32 accumulation on the MXU.
    h = jnp.dot(x_ref[...], w1_ref[...], preferred_element_type=jnp.float32)
    h = h + b1_ref[...]
    x1_ref[...] = h.astype(x1_ref.dtype)
    # fc2 on the lane-dense 128-wide padded W2: [TB,128] @ [128,128].
    logits = jnp.dot(h.astype(w2_ref.dtype), w2_ref[...],
                     preferred_element_type=jnp.float32)
    # Only the first 8 columns go back to HBM (32 B/row instead of 512 B/row);
    # padded columns 5..7 are exactly zero (zero W2/b2 padding), not garbage.
    x2_ref[...] = (logits[:, :PAD_CLS] + b2_ref[...]).astype(x2_ref.dtype)


@functools.partial(jax.jit, static_argnames=("block_b", "use_bf16"))
def emotion_cls_forward(x, w1, b1, w2, b2, *, block_b=DEFAULT_TB, use_bf16=True):
    """x: [B,256]; w1: [256,128]; b1: [1,128]; w2: [128,5]; b2: [1,5].

    Returns (x1 [B,128] f32, x2 [B,5] f32) matching the PyTorch module.
    """
    B = x.shape[0]

    # fc2 weight padded to a lane-dense 128-wide matmul; bias padded to the
    # 8-wide writeback slab. Padded columns are zero -> x2[:, 5:8] is zero.
    w2_pad = jnp.zeros((HIDDEN, PAD_MXU), w2.dtype).at[:, :NUM_CLASSES].set(w2)
    b2_pad = jnp.zeros((1, PAD_CLS), b2.dtype).at[:, :NUM_CLASSES].set(b2)

    if use_bf16:
        # Production path: halves activation/weight HBM bytes; MXU accumulates
        # in f32; outputs stay f32. x1 precision drops to ~1e-2 relative.
        x_in, w1_in, w2_in = (x.astype(jnp.bfloat16),
                              w1.astype(jnp.bfloat16),
                              w2_pad.astype(jnp.bfloat16))
    else:
        # Exact-f32 escape hatch (on v7x this is emulated via multi-pass bf16).
        x_in, w1_in, w2_in = x, w1, w2_pad

    # Batch tile: sublane-rounded, and split into >= 2 grid steps when B > 8 so
    # the "parallel" batch axis can shard across v7x's two TensorCores.
    if B <= 8:
        tb = B                                  # single block == full batch dim
    else:
        tb = min(block_b, _round_up(B, 8))
        if pl.cdiv(B, tb) < 2:
            tb = _round_up(pl.cdiv(B, 2), 8)
    grid = (pl.cdiv(B, tb),)                    # ragged last block is clipped
                                                # by Pallas (no jnp.pad copy).

    itemsize_in = x_in.dtype.itemsize
    row_bytes = INPUT_DIM * itemsize_in + HIDDEN * 4 + PAD_CLS * 4
    w_bytes = ((INPUT_DIM * HIDDEN + HIDDEN * PAD_MXU) * w1_in.dtype.itemsize
               + (HIDDEN + PAD_CLS) * 4)
    flops = 2 * B * (INPUT_DIM * HIDDEN + HIDDEN * PAD_MXU)
    bytes_accessed = B * row_bytes + w_bytes

    # Explicit scoped-VMEM limit: double-buffered batch tiles + weights + slack,
    # capped at 48 MiB to stay inside v7x's 64 MiB physical VMEM.
    tile_vmem = tb * row_bytes
    vmem_limit = int(min(4 * tile_vmem + 2 * w_bytes + (4 << 20), 48 << 20))

    x1, x2_pad = pl.pallas_call(
        emotion_cls_kernel,
        out_shape=(
            jax.ShapeDtypeStruct((B, HIDDEN), jnp.float32),
            jax.ShapeDtypeStruct((B, PAD_CLS), jnp.float32),
        ),
        grid_spec=pltpu.PrefetchScalarGridSpec(
            num_scalar_prefetch=0,
            grid=grid,
            in_specs=[
                # activations: tiled over batch -> pipelined DMA
                pl.BlockSpec((tb, INPUT_DIM), lambda i: (i, 0)),
                # weights / biases: constant index_map -> stay VMEM-resident
                pl.BlockSpec((INPUT_DIM, HIDDEN), lambda i: (0, 0)),
                pl.BlockSpec((1, HIDDEN), lambda i: (0, 0)),
                pl.BlockSpec((HIDDEN, PAD_MXU), lambda i: (0, 0)),
                pl.BlockSpec((1, PAD_CLS), lambda i: (0, 0)),
            ],
            out_specs=(
                pl.BlockSpec((tb, HIDDEN), lambda i: (i, 0)),
                pl.BlockSpec((tb, PAD_CLS), lambda i: (i, 0)),
            ),
        ),
        compiler_params=pltpu.CompilerParams(
            dimension_semantics=("parallel",),   # batch tiles are independent
            vmem_limit_bytes=vmem_limit,
        ),
        cost_estimate=pl.CostEstimate(
            flops=flops, transcendentals=0, bytes_accessed=bytes_accessed),
    )(x_in, w1_in, b1, w2_in, b2_pad)

    # Tiny (B, 8) -> (B, 5) slice; padded columns are exact zeros, not junk.
    return x1, x2_pad[:, :NUM_CLASSES]


def init_params(key):
    """Deterministic init mirroring nn.Linear shapes (weights stored [in,out])."""
    k1, k2, k3, k4 = jax.random.split(key, 4)
    bound1 = 1.0 / (INPUT_DIM ** 0.5)
    bound2 = 1.0 / (HIDDEN ** 0.5)
    w1 = jax.random.uniform(k1, (INPUT_DIM, HIDDEN), jnp.float32, -bound1, bound1)
    b1 = jax.random.uniform(k2, (1, HIDDEN), jnp.float32, -bound1, bound1)
    w2 = jax.random.uniform(k3, (HIDDEN, NUM_CLASSES), jnp.float32, -bound2, bound2)
    b2 = jax.random.uniform(k4, (1, NUM_CLASSES), jnp.float32, -bound2, bound2)
    return w1, b1, w2, b2


if __name__ == "__main__":
    key = jax.random.PRNGKey(0)
    kx, kp = jax.random.split(key)
    B = 16
    x = jax.random.normal(kx, (B, INPUT_DIM), jnp.float32)
    w1, b1, w2, b2 = init_params(kp)

    # plain-JAX reference (module has no nonlinearity between fc1 and fc2)
    ref_x1 = x @ w1 + b1
    ref_x2 = ref_x1 @ w2 + b2

    # Default production path (bf16 inputs, f32 accumulate); B=16 -> 2 grid steps.
    x1, x2 = emotion_cls_forward(x, w1, b1, w2, b2)
    jax.block_until_ready((x1, x2))
    assert x1.shape == (B, HIDDEN) and x2.shape == (B, NUM_CLASSES)
    assert jnp.allclose(x1, ref_x1, atol=5e-2, rtol=5e-2)
    assert jnp.allclose(x2, ref_x2, atol=5e-2, rtol=5e-2)

    # Ragged batch (B not a multiple of the tile): last block clipped by Pallas,
    # no jnp.pad of x and no [:B] output slices.
    B2 = 20
    x_big = jax.random.normal(kx, (B2, INPUT_DIM), jnp.float32)
    y1, y2 = emotion_cls_forward(x_big, w1, b1, w2, b2, block_b=8)
    jax.block_until_ready((y1, y2))
    ref_y1 = x_big @ w1 + b1
    assert y1.shape == (B2, HIDDEN) and y2.shape == (B2, NUM_CLASSES)
    assert jnp.allclose(y1, ref_y1, atol=5e-2, rtol=5e-2)
    assert jnp.allclose(y2, ref_y1 @ w2 + b2, atol=5e-2, rtol=5e-2)

    # Exact f32 path (escape hatch; bf16-emulated MXU on v7x, still ~f32 accurate).
    z1, z2 = emotion_cls_forward(x, w1, b1, w2, b2, use_bf16=False)
    jax.block_until_ready((z1, z2))
    assert jnp.allclose(z1, ref_x1, atol=2e-5, rtol=1e-5)
    assert jnp.allclose(z2, ref_x2, atol=2e-5, rtol=1e-5)

    print("KERNEL_OK")
</pallas_src>

<mosaic_0001>
module attributes {stable_mosaic.version = 11 : i64} {
  func.func @emotion_cls_kernel(%arg0: i32, %arg1: memref<8x256xbf16, #tpu.memory_space<vmem>>, %arg2: memref<256x128xbf16, #tpu.memory_space<vmem>>, %arg3: memref<1x128xf32, #tpu.memory_space<vmem>>, %arg4: memref<128x128xbf16, #tpu.memory_space<vmem>>, %arg5: memref<1x8xf32, #tpu.memory_space<vmem>>, %arg6: memref<8x128xf32, #tpu.memory_space<vmem>>, %arg7: memref<8x8xf32, #tpu.memory_space<vmem>>) attributes {dimension_semantics = [#tpu.dimension_semantics<parallel>], iteration_bounds = array<i64: 2>, scalar_prefetch = 0 : i64, scratch_operands = 0 : i64, tpu.core_type = #tpu.core_type<tc>, window_params = [{transform_indices = @transform_0, window_bounds = array<i64: 8, 256>}, {pipeline_mode = #tpu.pipeline_mode<synchronous>, transform_indices = @transform_1, window_bounds = array<i64: 256, 128>}, {pipeline_mode = #tpu.pipeline_mode<synchronous>, transform_indices = @transform_2, window_bounds = array<i64: 1, 128>}, {pipeline_mode = #tpu.pipeline_mode<synchronous>, transform_indices = @transform_3, window_bounds = array<i64: 128, 128>}, {pipeline_mode = #tpu.pipeline_mode<synchronous>, transform_indices = @transform_4, window_bounds = array<i64: 1, 8>}, {transform_indices = @transform_5, window_bounds = array<i64: 8, 128>}, {transform_indices = @transform_6, window_bounds = array<i64: 8, 8>}]} {
    %c0 = arith.constant 0 : index
    %c0_0 = arith.constant 0 : index
    %0 = vector.load %arg1[%c0, %c0_0] : memref<8x256xbf16, #tpu.memory_space<vmem>>, vector<8x256xbf16>
    %c0_1 = arith.constant 0 : index
    %c0_2 = arith.constant 0 : index
    %1 = vector.load %arg2[%c0_1, %c0_2] : memref<256x128xbf16, #tpu.memory_space<vmem>>, vector<256x128xbf16>
    %cst = arith.constant dense<0.000000e+00> : vector<8x128xf32>
    %2 = tpu.matmul %0, %1, %cst {dimension_numbers = #tpu.dot_dimension_numbers<[1], [0], [0], [1], [0, 0, 1, 1], [], []>} : vector<8x256xbf16>, vector<256x128xbf16>, vector<8x128xf32> -> vector<8x128xf32>
    %c0_3 = arith.constant 0 : index
    %c0_4 = arith.constant 0 : index
    %3 = vector.load %arg3[%c0_3, %c0_4] : memref<1x128xf32, #tpu.memory_space<vmem>>, vector<1x128xf32>
    %4 = vector.broadcast %3 : vector<1x128xf32> to vector<8x128xf32>
    %5 = arith.addf %2, %4 : vector<8x128xf32>
    %c0_5 = arith.constant 0 : index
    %c0_6 = arith.constant 0 : index
    %6 = vector.load %arg6[%c0_5, %c0_6] : memref<8x128xf32, #tpu.memory_space<vmem>>, vector<8x128xf32>
    tpu.vector_store %arg6[%c0_5, %c0_6], %5 {strides = array<i32>} : memref<8x128xf32, #tpu.memory_space<vmem>>, vector<8x128xf32>,
    %7 = arith.truncf %5 : vector<8x128xf32> to vector<8x128xbf16>
    %c0_7 = arith.constant 0 : index
    %c0_8 = arith.constant 0 : index
    %8 = vector.load %arg4[%c0_7, %c0_8] : memref<128x128xbf16, #tpu.memory_space<vmem>>, vector<128x128xbf16>
    %cst_9 = arith.constant dense<0.000000e+00> : vector<8x128xf32>
    %9 = tpu.matmul %7, %8, %cst_9 {dimension_numbers = #tpu.dot_dimension_numbers<[1], [0], [0], [1], [0, 0, 1, 1], [], []>} : vector<8x128xbf16>, vector<128x128xbf16>, vector<8x128xf32> -> vector<8x128xf32>
    %10 = vector.extract_strided_slice %9 {offsets = [0, 0], sizes = [8, 8], strides = [1, 1]} : vector<8x128xf32> to vector<8x8xf32>
    %c0_10 = arith.constant 0 : index
    %c0_11 = arith.constant 0 : index
    %11 = vector.load %arg5[%c0_10, %c0_11] : memref<1x8xf32, #tpu.memory_space<vmem>>, vector<1x8xf32>
    %12 = vector.broadcast %11 : vector<1x8xf32> to vector<8x8xf32>
    %13 = arith.addf %10, %12 : vector<8x8xf32>
    %c0_12 = arith.constant 0 : index
    %c0_13 = arith.constant 0 : index
    %14 = vector.load %arg7[%c0_12, %c0_13] : memref<8x8xf32, #tpu.memory_space<vmem>>, vector<8x8xf32>
    tpu.vector_store %arg7[%c0_12, %c0_13], %13 {strides = array<i32>} : memref<8x8xf32, #tpu.memory_space<vmem>>, vector<8x8xf32>,
    return
  }
  func.func @transform_0(%arg0: i32) -> (i32, i32) {
    %c0_i32 = arith.constant 0 : i32
    %c0_i32_0 = arith.constant 0 : i32
    return %arg0, %c0_i32 : i32, i32
  }
  func.func @transform_1(%arg0: i32) -> (i32, i32) {
    %c0_i32 = arith.constant 0 : i32
    %c0_i32_0 = arith.constant 0 : i32
    %c0_i32_1 = arith.constant 0 : i32
    return %c0_i32, %c0_i32_0 : i32, i32
  }
  func.func @transform_2(%arg0: i32) -> (i32, i32) {
    %c0_i32 = arith.constant 0 : i32
    %c0_i32_0 = arith.constant 0 : i32
    %c0_i32_1 = arith.constant 0 : i32
    return %c0_i32, %c0_i32_0 : i32, i32
  }
  func.func @transform_3(%arg0: i32) -> (i32, i32) {
    %c0_i32 = arith.constant 0 : i32
    %c0_i32_0 = arith.constant 0 : i32
    %c0_i32_1 = arith.constant 0 : i32
    return %c0_i32, %c0_i32_0 : i32, i32
  }
  func.func @transform_4(%arg0: i32) -> (i32, i32) {
    %c0_i32 = arith.constant 0 : i32
    %c0_i32_0 = arith.constant 0 : i32
    %c0_i32_1 = arith.constant 0 : i32
    return %c0_i32, %c0_i32_0 : i32, i32
  }
  func.func @transform_5(%arg0: i32) -> (i32, i32) {
    %c0_i32 = arith.constant 0 : i32
    %c0_i32_0 = arith.constant 0 : i32
    return %arg0, %c0_i32 : i32, i32
  }
  func.func @transform_6(%arg0: i32) -> (i32, i32) {
    %c0_i32 = arith.constant 0 : i32
    %c0_i32_0 = arith.constant 0 : i32
    return %arg0, %c0_i32 : i32, i32
  }
}

</mosaic_0001>

<llo_original>
// kernel: emotion_cls_forward.1
$region0: #{emotion_cls_forward.1}
  #allocation0 [shape = 'u32[]', space=smem, size = 0x4, offset = 0x4, fixed_abs, tag = 'smem constant byte address 0x4 - core index']
  #allocation1 [shape = 'u32[72,128]{1,0:T(1,128)}', space=vmem, size = 0x9000, scoped, tag = 'internal scratch']
  %s0 = inlined_call_operand.vmem [shape: bf16[16,256], index: 0, kind: input, shape index: {}]
  %s1 = inlined_call_operand.vmem [shape: bf16[256,128], index: 1, kind: input, shape index: {}]
  %s2 = inlined_call_operand.vmem [shape: f32[1,128], index: 2, kind: input, shape index: {}]
  %s3 = inlined_call_operand.vmem [shape: bf16[128,128], index: 3, kind: input, shape index: {}]
  %s4 = inlined_call_operand.vmem [shape: f32[1,8], index: 4, kind: input, shape index: {}]
  %s5 = inlined_call_operand.hbm [shape: f32[16,128], index: 5, kind: output, shape index: {0}]
  %s6 = inlined_call_operand.vmem [shape: f32[16,8], index: 6, kind: output, shape index: {1}]
  %7 = xla_tuple %s5, %s6
  %s8 = sld [smem:[#allocation0]]
  $region61: #{emotion_cls_forward.1} parent=0
    _
  %s10 = ssub.s32 1, %s8
  %s11 = scalar_select 0, %s10, %s8
  $region1: #{emotion_cls_forward.1} parent=0
    #allocation2 [shape = 'u8[8192]{0}', space=vmem, size = 0x2000, scoped, tag = 'output window, operand 0']
    #allocation3 [shape = 's32[2]{0}', space=sflag, size = 0x8, scoped, tag = 'scoped memory for emotion_cls_forward.1']
    %12 = vsyncpa [#allocation3], 0
    %s13 = scalar_lea.sflag [#allocation3], 1
    %14 = vsyncpa %s13, 0
    loop: start=0, step=1, limit=4
    $region2: #{emotion_cls_forward.1} parent=1 // loop_pre_header
      _
    $region3: #{emotion_cls_forward.1} parent=1 // loop_header
      %s16 = sphi 0, %s20
      %p17 = scmp.ge.s32.totalorder %s16, 4
      %s26 = sphi 0, %s28
      %s29 = sphi 0, %s26
      %s30 = sphi 0, %s29
      %s46 = sphi 0, %s30
      %s50 = sphi 0, %s50
      %s52 = sphi 0, %s50
      %s53 = sphi 0, %s52
      %s67 = sphi 0, %s53
      %s71 = sphi 0, %s71
      %s73 = sphi 0, %s71
      %s74 = sphi 0, %s73
      %s88 = sphi 0, %s74
      %s92 = sphi 0, %s92
      %s94 = sphi 0, %s92
      %s95 = sphi 0, %s94
      %s109 = sphi 0, %s95
      %s113 = sphi 0, %s113
      %s115 = sphi 0, %s113
      %s116 = sphi 0, %s115
      %s130 = sphi 0, %s116
      %s136 = sphi 0, %s138
      %s139 = sphi 0, %s136
      %s140 = sphi 0, %s139
      %s156 = sphi 0, %s140
      %s162 = sphi 0, %s164
      %s165 = sphi 0, %s162
      %s166 = sphi 0, %s165
      %s182 = sphi 0, %s166
    $region4: #{emotion_cls_forward.1} parent=1 // loop_header_branch
      %19 = sbr.rel (%p17) target = $region8
    $region5: #{emotion_cls_forward.1} parent=1 // loop_body
      %s21 = ssub.s32 %s16, 1
      %s22 = ssub.s32 %s16, 2
      %s23 = sadd.s32 %s16, 1
      %s24 = ssub.s32 %s16, %s23
      %p25 = scmp.eq.s32.totalorder %s24, 0
      %s27 = sadd.s32 %s26, 1
      %s28 = scalar_select %p25, %s26, %s27
      %p31 = pneg %p25
      %p32 = scmp.eq.s32.totalorder %s16, 1
      %p33 = por %p31, %p32
      %p34 = scmp.ne.s32.totalorder %s26, %s29
      %p35 = scmp.eq.s32.totalorder %s16, 0
      %p36 = por %p34, %p35
      %p37 = scmp.ne.s32.totalorder %s26, %s29
      %p38 = scmp.eq.s32.totalorder %s21, 1
      %p39 = por %p37, %p38
      %p40 = scmp.ne.s32.totalorder %s29, %s30
      %p41 = scmp.eq.s32.totalorder %s21, 0
      %p42 = por %p40, %p41
      %p43 = scmp.ne.s32.totalorder %s29, %s30
      %p44 = scmp.eq.s32.totalorder %s22, 1
      %p45 = por %p43, %p44
      %p47 = scmp.ne.s32.totalorder %s30, %s46
      %p48 = scmp.eq.s32.totalorder %s22, 0
      %p49 = por %p47, %p48
      %s51 = sadd.s32 %s50, 1
      %p54 = scmp.eq.s32.totalorder %s16, 1
      %p55 = scmp.ne.s32.totalorder %s50, %s52
      %p56 = scmp.eq.s32.totalorder %s16, 0
      %p57 = por %p55, %p56
      %p58 = scmp.ne.s32.totalorder %s50, %s52
      %p59 = scmp.eq.s32.totalorder %s21, 1
      %p60 = por %p58, %p59
      %p61 = scmp.ne.s32.totalorder %s52, %s53
      %p62 = scmp.eq.s32.totalorder %s21, 0
      %p63 = por %p61, %p62
      %p64 = scmp.ne.s32.totalorder %s52, %s53
      %p65 = scmp.eq.s32.totalorder %s22, 1
      %p66 = por %p64, %p65
      %p68 = scmp.ne.s32.totalorder %s53, %s67
      %p69 = scmp.eq.s32.totalorder %s22, 0
      %p70 = por %p68, %p69
      %s72 = sadd.s32 %s71, 1
      %p75 = scmp.eq.s32.totalorder %s16, 1
      %p76 = scmp.ne.s32.totalorder %s71, %s73
      %p77 = scmp.eq.s32.totalorder %s16, 0
      %p78 = por %p76, %p77
      %p79 = scmp.ne.s32.totalorder %s71, %s73
      %p80 = scmp.eq.s32.totalorder %s21, 1
      %p81 = por %p79, %p80
      %p82 = scmp.ne.s32.totalorder %s73, %s74
      %p83 = scmp.eq.s32.totalorder %s21, 0
      %p84 = por %p82, %p83
      %p85 = scmp.ne.s32.totalorder %s73, %s74
      %p86 = scmp.eq.s32.totalorder %s22, 1
      %p87 = por %p85, %p86
      %p89 = scmp.ne.s32.totalorder %s74, %s88
      %p90 = scmp.eq.s32.totalorder %s22, 0
      %p91 = por %p89, %p90
      %s93 = sadd.s32 %s92, 1
      %p96 = scmp.eq.s32.totalorder %s16, 1
      %p97 = scmp.ne.s32.totalorder %s92, %s94
      %p98 = scmp.eq.s32.totalorder %s16, 0
      %p99 = por %p97, %p98
      %p100 = scmp.ne.s32.totalorder %s92, %s94
      %p101 = scmp.eq.s32.totalorder %s21, 1
      %p102 = por %p100, %p101
      %p103 = scmp.ne.s32.totalorder %s94, %s95
      %p104 = scmp.eq.s32.totalorder %s21, 0
      %p105 = por %p103, %p104
      %p106 = scmp.ne.s32.totalorder %s94, %s95
      %p107 = scmp.eq.s32.totalorder %s22, 1
      %p108 = por %p106, %p107
      %p110 = scmp.ne.s32.totalorder %s95, %s109
      %p111 = scmp.eq.s32.totalorder %s22, 0
      %p112 = por %p110, %p111
      %s114 = sadd.s32 %s113, 1
      %p117 = scmp.eq.s32.totalorder %s16, 1
      %p118 = scmp.ne.s32.totalorder %s113, %s115
      %p119 = scmp.eq.s32.totalorder %s16, 0
      %p120 = por %p118, %p119
      %p121 = scmp.ne.s32.totalorder %s113, %s115
      %p122 = scmp.eq.s32.totalorder %s21, 1
      %p123 = por %p121, %p122
      %p124 = scmp.ne.s32.totalorder %s115, %s116
      %p125 = scmp.eq.s32.totalorder %s21, 0
      %p126 = por %p124, %p125
      %p127 = scmp.ne.s32.totalorder %s115, %s116
      %p128 = scmp.eq.s32.totalorder %s22, 1
      %p129 = por %p127, %p128
      %p131 = scmp.ne.s32.totalorder %s116, %s130
      %p132 = scmp.eq.s32.totalorder %s22, 0
      %p133 = por %p131, %p132
      %s134 = ssub.s32 %s16, %s23
      %p135 = scmp.eq.s32.totalorder %s134, 0
      %s137 = sadd.s32 %s136, 1
      %s138 = scalar_select %p135, %s136, %s137
      %p141 = pneg %p135
      %p142 = scmp.eq.s32.totalorder %s16, 1
      %p143 = por %p141, %p142
      %p144 = scmp.ne.s32.totalorder %s136, %s139
      %p145 = scmp.eq.s32.totalorder %s16, 0
      %p146 = por %p144, %p145
      %p147 = scmp.ne.s32.totalorder %s136, %s139
      %p148 = scmp.eq.s32.totalorder %s21, 1
      %p149 = por %p147, %p148
      %p150 = scmp.ne.s32.totalorder %s139, %s140
      %p151 = scmp.eq.s32.totalorder %s21, 0
      %p152 = por %p150, %p151
      %p153 = scmp.ne.s32.totalorder %s139, %s140
      %p154 = scmp.eq.s32.totalorder %s22, 1
      %p155 = por %p153, %p154
      %p157 = scmp.ne.s32.totalorder %s140, %s156
      %p158 = scmp.eq.s32.totalorder %s22, 0
      %p159 = por %p157, %p158
      %s160 = ssub.s32 %s16, %s23
      %p161 = scmp.eq.s32.totalorder %s160, 0
      %s163 = sadd.s32 %s162, 1
      %s164 = scalar_select %p161, %s162, %s163
      %p167 = pneg %p161
      %p168 = scmp.eq.s32.totalorder %s16, 1
      %p169 = por %p167, %p168
      %p170 = scmp.ne.s32.totalorder %s162, %s165
      %p171 = scmp.eq.s32.totalorder %s16, 0
      %p172 = por %p170, %p171
      %p173 = scmp.ne.s32.totalorder %s162, %s165
      %p174 = scmp.eq.s32.totalorder %s21, 1
      %p175 = por %p173, %p174
      %p176 = scmp.ne.s32.totalorder %s165, %s166
      %p177 = scmp.eq.s32.totalorder %s21, 0
      %p178 = por %p176, %p177
      %p179 = scmp.ne.s32.totalorder %s165, %s166
      %p180 = scmp.eq.s32.totalorder %s22, 1
      %p181 = por %p179, %p180
      %p183 = scmp.ne.s32.totalorder %s166, %s182
      %p184 = scmp.eq.s32.totalorder %s22, 0
      %p185 = por %p183, %p184
      %p186 = scmp.le.s32.totalorder 1, %s16
      %p187 = scmp.lt.s32.totalorder %s16, 3
      %p188 = pnand %p186, %p187
      %p189 = pneg %p188
      // Predicated region
      $region9: #{emotion_cls_forward.1} parent=5 // pred_check
        _
      $region10: #{emotion_cls_forward.1} parent=5 // pred_check_branch
        %191 = sbr.rel (%p188) target = $region12
      $region11: #{emotion_cls_forward.1} parent=5 // pred_region
        %s192 = ssub.s32 %s16, 1
        // Predicated region
        $region13: #{emotion_cls_forward.1} parent=11 // pred_check
          %p193 = pneg %p63
        $region14: #{emotion_cls_forward.1} parent=11 // pred_check_branch
          %195 = sbr.rel (%p193) target = $region16
        $region15: #{emotion_cls_forward.1} parent=11 // pred_region
          _
        $region16: #{emotion_cls_forward.1} parent=11 // pred_fallthru
          _
        // Predicated region
        $region17: #{emotion_cls_forward.1} parent=11 // pred_check
          %p196 = pneg %p84
        $region18: #{emotion_cls_forward.1} parent=11 // pred_check_branch
          %198 = sbr.rel (%p196) target = $region20
        $region19: #{emotion_cls_forward.1} parent=11 // pred_region
          _
        $region20: #{emotion_cls_forward.1} parent=11 // pred_fallthru
          _
        // Predicated region
        $region21: #{emotion_cls_forward.1} parent=11 // pred_check
          %p199 = pneg %p105
        $region22: #{emotion_cls_forward.1} parent=11 // pred_check_branch
          %201 = sbr.rel (%p199) target = $region24
        $region23: #{emotion_cls_forward.1} parent=11 // pred_region
          _
        $region24: #{emotion_cls_forward.1} parent=11 // pred_fallthru
          _
        // Predicated region
        $region25: #{emotion_cls_forward.1} parent=11 // pred_check
          %p202 = pneg %p126
        $region26: #{emotion_cls_forward.1} parent=11 // pred_check_branch
          %204 = sbr.rel (%p202) target = $region28
        $region27: #{emotion_cls_forward.1} parent=11 // pred_region
          _
        $region28: #{emotion_cls_forward.1} parent=11 // pred_fallthru
          _
      $region12: #{emotion_cls_forward.1} parent=5 // pred_fallthru
        _
      %p205 = scmp.lt.s32.totalorder %s16, 2
      // Predicated region
      $region29: #{emotion_cls_forward.1} parent=5 // pred_check
        %p206 = pneg %p205
      $region30: #{emotion_cls_forward.1} parent=5 // pred_check_branch
        %208 = sbr.rel (%p206) target = $region32
      $region31: #{emotion_cls_forward.1} parent=5 // pred_region
        // Predicated region
        $region33: #{emotion_cls_forward.1} parent=31 // pred_check
          %p209 = pneg %p36
        $region34: #{emotion_cls_forward.1} parent=31 // pred_check_branch
          %211 = sbr.rel (%p209) target = $region36
        $region35: #{emotion_cls_forward.1} parent=31 // pred_region
          %p212 = scmp.lt.s32.totalorder %s16, 1
          %s213 = scalar_select %p212, %s16, 1
          %s214 = smul.addr %s213, 2
          %s215 = smul.addr %s214, 4
          %s216 = scalar_lea.vmem %s0, %s215
        $region36: #{emotion_cls_forward.1} parent=31 // pred_fallthru
          _
      $region32: #{emotion_cls_forward.1} parent=5 // pred_fallthru
        _
      %p217 = scmp.le.s32.totalorder 1, %s16
      %p218 = scmp.lt.s32.totalorder %s16, 3
      %p219 = pnand %p217, %p218
      %p220 = pneg %p219
      // Predicated region
      $region37: #{emotion_cls_forward.1} parent=5 // pred_check
        _
      $region38: #{emotion_cls_forward.1} parent=5 // pred_check_branch
        %222 = sbr.rel (%p219) target = $region40
      $region39: #{emotion_cls_forward.1} parent=5 // pred_region
        %s223 = ssub.s32 %s16, 1
        %p224 = scmp.lt.s32.totalorder %s21, 1
        %s225 = scalar_select %p224, %s21, 1
        %s226 = smul.addr %s225, 2
        %s227 = smul.addr %s226, 4
        %s228 = scalar_lea.vmem %s0, %s227
        %p229 = pneg %p42
        %p230 = pneg %p39
        %p231 = pneg %p63
        %p232 = pneg %p60
        %p233 = pneg %p84
        %p234 = pneg %p81
        %p235 = pneg %p105
        %p236 = pneg %p102
        %p237 = pneg %p126
        %p238 = pneg %p123
        %p239 = pneg %p152
        %p240 = pneg %p149
        %s241 = sand.u32 %s139, 1
        %s242 = scalar_lea.sflag [#allocation3], %s241
        %s243 = sand.u32 %s139, 1
        %s244 = smul.addr %s243, 8
        %s245 = scalar_lea.vmem [#allocation2], %s244
        %p246 = pneg %p178
        %p247 = pneg %p175
        %p248 = scmp.lt.s32.totalorder %s21, 1
        %s249 = scalar_select %p248, %s21, 1
        %s250 = smul.addr %s249, 8
        %s251 = scalar_lea.vmem %s6, %s250
        %p252 = scmp.lt.s32.totalorder %s21, 1
        %s253 = scalar_select %p252, %s21, 1
        %s254 = smul.addr %s253, 2
        %s255 = smul.addr %s254, 4
        %s256 = scalar_lea.vmem %s0, %s255
        %p257 = scmp.lt.s32.totalorder %s21, 1
        %s258 = scalar_select %p257, %s21, 1
        %s259 = smul.addr %s258, 8
        %s260 = scalar_lea.vmem %s6, %s259
        %v261 = vld [vmem:[%s256] sm:$0xff]
        %v262 = vld [vmem:[%s1] sm:$0xf]
        %v263 = vld [vmem:[%s1 + $0x4] sm:$0xf]
        %v264 = vld [vmem:[%s1 + $0x8] sm:$0xf]
        %v265 = vld [vmem:[%s1 + $0xc] sm:$0xf]
        %v266 = vld [vmem:[%s1 + $0x10] sm:$0xf]
        %v267 = vld [vmem:[%s1 + $0x14] sm:$0xf]
        %v268 = vld [vmem:[%s1 + $0x18] sm:$0xf]
        %v269 = vld [vmem:[%s1 + $0x1c] sm:$0xf]
        %v270 = vld [vmem:[%s1 + $0x20] sm:$0xf]
        %v271 = vld [vmem:[%s1 + $0x24] sm:$0xf]
        %v272 = vld [vmem:[%s1 + $0x28] sm:$0xf]
        %v273 = vld [vmem:[%s1 + $0x2c] sm:$0xf]
        %v274 = vld [vmem:[%s1 + $0x30] sm:$0xf]
        %v275 = vld [vmem:[%s1 + $0x34] sm:$0xf]
        %v276 = vld [vmem:[%s1 + $0x38] sm:$0xf]
        %v277 = vld [vmem:[%s1 + $0x3c] sm:$0xf]
        %v278 = vld [vmem:[%s1 + $0x40] sm:$0xf]
        %v279 = vld [vmem:[%s1 + $0x44] sm:$0xf]
        %v280 = vld [vmem:[%s1 + $0x48] sm:$0xf]
        %v281 = vld [vmem:[%s1 + $0x4c] sm:$0xf]
        %v282 = vld [vmem:[%s1 + $0x50] sm:$0xf]
        %v283 = vld [vmem:[%s1 + $0x54] sm:$0xf]
        %v284 = vld [vmem:[%s1 + $0x58] sm:$0xf]
        %v285 = vld [vmem:[%s1 + $0x5c] sm:$0xf]
        %v286 = vld [vmem:[%s1 + $0x60] sm:$0xf]
        %v287 = vld [vmem:[%s1 + $0x64] sm:$0xf]
        %v288 = vld [vmem:[%s1 + $0x68] sm:$0xf]
        %v289 = vld [vmem:[%s1 + $0x6c] sm:$0xf]
        %v290 = vld [vmem:[%s1 + $0x70] sm:$0xf]
        %v291 = vld [vmem:[%s1 + $0x74] sm:$0xf]
        %v292 = vld [vmem:[%s1 + $0x78] sm:$0xf]
        %v293 = vld [vmem:[%s1 + $0x7c] sm:$0xf]
        %v294 = vld [vmem:[%s2] sm:$0x1]
        %v296 = vperm.slane %v294, 0
        %v299 = vunpack.c.l.b16 %v261
        %v300 = vunpack.c.h.b16 %v261
        %v301 = vpack.c.b16 %v299, %v299
        %v302 = vpack.c.b16 %v300, %v300
        %v337 = vunpack.c.l.b16 %v262
        %v338 = vunpack.c.l.b16 %v263
        %v339 = vunpack.c.l.b16 %v264
        %v340 = vunpack.c.l.b16 %v265
        %v341 = vunpack.c.l.b16 %v266
        %v342 = vunpack.c.l.b16 %v267
        %v343 = vunpack.c.l.b16 %v268
        %v344 = vunpack.c.l.b16 %v269
        %v345 = vunpack.c.l.b16 %v270
        %v346 = vunpack.c.l.b16 %v271
        %v347 = vunpack.c.l.b16 %v272
        %v348 = vunpack.c.l.b16 %v273
        %v349 = vunpack.c.l.b16 %v274
        %v350 = vunpack.c.l.b16 %v275
        %v351 = vunpack.c.l.b16 %v276
        %v352 = vunpack.c.l.b16 %v277
        %v353 = vunpack.c.l.b16 %v278
        %v354 = vunpack.c.l.b16 %v279
        %v355 = vunpack.c.l.b16 %v280
        %v356 = vunpack.c.l.b16 %v281
        %v357 = vunpack.c.l.b16 %v282
        %v358 = vunpack.c.l.b16 %v283
        %v359 = vunpack.c.l.b16 %v284
        %v360 = vunpack.c.l.b16 %v285
        %v361 = vunpack.c.l.b16 %v286
        %v362 = vunpack.c.l.b16 %v287
        %v363 = vunpack.c.l.b16 %v288
        %v364 = vunpack.c.l.b16 %v289
        %v365 = vunpack.c.l.b16 %v290
        %v366 = vunpack.c.l.b16 %v291
        %v367 = vunpack.c.l.b16 %v292
        %v368 = vunpack.c.l.b16 %v293
        %v369 = vpack.c.b16 %v338, %v337
        %v370 = vpack.c.b16 %v340, %v339
        %v371 = vpack.c.b16 %v342, %v341
        %v372 = vpack.c.b16 %v344, %v343
        %v373 = vpack.c.b16 %v346, %v345
        %v374 = vpack.c.b16 %v348, %v347
        %v375 = vpack.c.b16 %v350, %v349
        %v376 = vpack.c.b16 %v352, %v351
        %v377 = vpack.c.b16 %v354, %v353
        %v378 = vpack.c.b16 %v356, %v355
        %v379 = vpack.c.b16 %v358, %v357
        %v380 = vpack.c.b16 %v360, %v359
        %v381 = vpack.c.b16 %v362, %v361
        %v382 = vpack.c.b16 %v364, %v363
        %v383 = vpack.c.b16 %v366, %v365
        %v384 = vpack.c.b16 %v368, %v367
        %401 = vmatpush.bf16.msra.mxu0 %v376
        %402 = vmatpush.bf16.msra.mxu0 %v375
        %403 = vmatpush.bf16.msra.mxu0 %v374
        %404 = vmatpush.bf16.msra.mxu0 %v373
        %405 = vmatpush.bf16.msra.mxu0 %v372
        %406 = vmatpush.bf16.msra.mxu0 %v371
        %407 = vmatpush.bf16.msra.mxu0 %v370
        %408 = vmatpush.bf16.msra.mxu0 %v369
        %409 = vmatmul.bf16.gmra.mxu0 %v301
        %v410 = vpop.f32.mrf.mxu0
        %v411 = vadd.f32 %v296, %v410
        %v412 = vpop.f32.mrf.mxu0
        %413 = vdwg.mxu0
        %414 = vmatpush.bf16.msra.mxu0 %v384
        %415 = vmatpush.bf16.msra.mxu0 %v383
        %416 = vmatpush.bf16.msra.mxu0 %v382
        %417 = vmatpush.bf16.msra.mxu0 %v381
        %418 = vmatpush.bf16.msra.mxu0 %v380
        %419 = vmatpush.bf16.msra.mxu0 %v379
        %420 = vmatpush.bf16.msra.mxu0 %v378
        %421 = vmatpush.bf16.msra.mxu0 %v377
        %422 = vmatmul.bf16.gmra.mxu0 %v302
        %v423 = vpop.f32.mrf.mxu0
        %v424 = vadd.f32 %v411, %v423
        %v425 = vpop.f32.mrf.mxu0
        %426 = vdwg.mxu0
        %427 = vst [vmem:[%s245] sm:$0xff] %v424
        %v428 = vpack.c.bf16 %v424, %v424
        %v429 = vld [vmem:[%s3] sm:$0xf]
        %v430 = vld [vmem:[%s3 + $0x4] sm:$0xf]
        %v431 = vld [vmem:[%s3 + $0x8] sm:$0xf]
        %v432 = vld [vmem:[%s3 + $0xc] sm:$0xf]
        %v433 = vld [vmem:[%s3 + $0x10] sm:$0xf]
        %v434 = vld [vmem:[%s3 + $0x14] sm:$0xf]
        %v435 = vld [vmem:[%s3 + $0x18] sm:$0xf]
        %v436 = vld [vmem:[%s3 + $0x1c] sm:$0xf]
        %v437 = vld [vmem:[%s3 + $0x20] sm:$0xf]
        %v438 = vld [vmem:[%s3 + $0x24] sm:$0xf]
        %v439 = vld [vmem:[%s3 + $0x28] sm:$0xf]
        %v440 = vld [vmem:[%s3 + $0x2c] sm:$0xf]
        %v441 = vld [vmem:[%s3 + $0x30] sm:$0xf]
        %v442 = vld [vmem:[%s3 + $0x34] sm:$0xf]
        %v443 = vld [vmem:[%s3 + $0x38] sm:$0xf]
        %v444 = vld [vmem:[%s3 + $0x3c] sm:$0xf]
        %v461 = vunpack.c.l.b16 %v429
        %v462 = vunpack.c.l.b16 %v430
        %v463 = vunpack.c.l.b16 %v431
        %v464 = vunpack.c.l.b16 %v432
        %v465 = vunpack.c.l.b16 %v433
        %v466 = vunpack.c.l.b16 %v434
        %v467 = vunpack.c.l.b16 %v435
        %v468 = vunpack.c.l.b16 %v436
        %v469 = vunpack.c.l.b16 %v437
        %v470 = vunpack.c.l.b16 %v438
        %v471 = vunpack.c.l.b16 %v439
        %v472 = vunpack.c.l.b16 %v440
        %v473 = vunpack.c.l.b16 %v441
        %v474 = vunpack.c.l.b16 %v442
        %v475 = vunpack.c.l.b16 %v443
        %v476 = vunpack.c.l.b16 %v444
        %v477 = vpack.c.b16 %v462, %v461
        %v478 = vpack.c.b16 %v464, %v463
        %v479 = vpack.c.b16 %v466, %v465
        %v480 = vpack.c.b16 %v468, %v467
        %v481 = vpack.c.b16 %v470, %v469
        %v482 = vpack.c.b16 %v472, %v471
        %v483 = vpack.c.b16 %v474, %v473
        %v484 = vpack.c.b16 %v476, %v475
        %493 = vmatpush.bf16.msra.mxu0 %v484
        %494 = vmatpush.bf16.msra.mxu0 %v483
        %495 = vmatpush.bf16.msra.mxu0 %v482
        %496 = vmatpush.bf16.msra.mxu0 %v481
        %497 = vmatpush.bf16.msra.mxu0 %v480
        %498 = vmatpush.bf16.msra.mxu0 %v479
        %499 = vmatpush.bf16.msra.mxu0 %v478
        %500 = vmatpush.bf16.msra.mxu0 %v477
        %501 = vmatmul.bf16.gmra.mxu0 %v428
        %v502 = vpop.f32.mrf.mxu0
        %v503 = vadd.f32 0.0, %v502
        %v504 = vpop.f32.mrf.mxu0
        %505 = vdwg.mxu0
        %v506 = vld [vmem:[%s4] sm:$0x1]
        %v508 = vperm.slane %v506, 0
        %v510 = vadd.f32 %v503, %v508
        %vm511 = vcmask 64512
        %512 = vst.msk [vmem:[%s260] sm:$0xff] %vm511, %v510
        %s513 = sand.u32 %s139, 1
        %s514 = scalar_lea.sflag [#allocation3], %s513
        %s515 = sand.u32 %s139, 1
        %s516 = smul.addr %s515, 8
        %s517 = scalar_lea.vmem [#allocation2], %s516
        %p518 = scmp.lt.s32.totalorder %s21, 1
        %s519 = scalar_select %p518, %s21, 1
        %s520 = smul.addr %s519, 8
        %s521 = scalar_lea.vmem %s6, %s520
        // Predicated region
        $region41: #{emotion_cls_forward.1} parent=39 // pred_check
          %p522 = pneg %p149
        $region42: #{emotion_cls_forward.1} parent=39 // pred_check_branch
          %524 = sbr.rel (%p522) target = $region44
        $region43: #{emotion_cls_forward.1} parent=39 // pred_region
          %526 = vsyncadd %s514, 0
          %s527 = smul.addr %s21, 8
          %s528 = scalar_lea.hbm %s5, %s527
          %s530 = sshll.u32 %s517, 4
          %s531 = int_to_ptr.vmem [resolvable:$true] %s530
          %s532 = sshll.u32 %s528, 4
          %s533 = int_to_ptr.hbm [resolvable:$true] %s532
          %535 = dma.vmem_to_hbm [thread:$0]  %s531, 128, %s533, %s514
        $region44: #{emotion_cls_forward.1} parent=39 // pred_fallthru
          _
        // Predicated region
        $region45: #{emotion_cls_forward.1} parent=39 // pred_check
          %p536 = pneg %p175
        $region46: #{emotion_cls_forward.1} parent=39 // pred_check_branch
          %538 = sbr.rel (%p536) target = $region48
        $region47: #{emotion_cls_forward.1} parent=39 // pred_region
          _
        $region48: #{emotion_cls_forward.1} parent=39 // pred_fallthru
          _
      $region40: #{emotion_cls_forward.1} parent=5 // pred_fallthru
        _
      %p539 = scmp.le.s32.totalorder 2, %s16
      // Predicated region
      $region49: #{emotion_cls_forward.1} parent=5 // pred_check
        %p540 = pneg %p539
      $region50: #{emotion_cls_forward.1} parent=5 // pred_check_branch
        %542 = sbr.rel (%p540) target = $region52
      $region51: #{emotion_cls_forward.1} parent=5 // pred_region
        %s543 = ssub.s32 %s16, 2
        // Predicated region
        $region53: #{emotion_cls_forward.1} parent=51 // pred_check
          %p544 = pneg %p155
        $region54: #{emotion_cls_forward.1} parent=51 // pred_check_branch
          %546 = sbr.rel (%p544) target = $region56
        $region55: #{emotion_cls_forward.1} parent=51 // pred_region
          %s547 = sand.u32 %s140, 1
          %s548 = scalar_lea.sflag [#allocation3], %s547
          %s549 = sand.u32 %s140, 1
          %s550 = smul.addr %s549, 8
          %s551 = scalar_lea.vmem [#allocation2], %s550
          %553 = dma.done %s548, 128
        $region56: #{emotion_cls_forward.1} parent=51 // pred_fallthru
          _
        // Predicated region
        $region57: #{emotion_cls_forward.1} parent=51 // pred_check
          %p554 = pneg %p181
        $region58: #{emotion_cls_forward.1} parent=51 // pred_check_branch
          %556 = sbr.rel (%p554) target = $region60
        $region59: #{emotion_cls_forward.1} parent=51 // pred_region
          %p557 = scmp.lt.s32.totalorder %s22, 1
          %s558 = scalar_select %p557, %s22, 1
          %s559 = smul.addr %s558, 8
          %s560 = scalar_lea.vmem %s6, %s559
        $region60: #{emotion_cls_forward.1} parent=51 // pred_fallthru
          _
      $region52: #{emotion_cls_forward.1} parent=5 // pred_fallthru
        _
    $region6: #{emotion_cls_forward.1} parent=1 // loop_footer
      %s20 = sadd.s32 1, %s16
    $region7: #{emotion_cls_forward.1} parent=1 // loop_footer_branch
      %15 = sbr.rel target = $region3
    $region8: #{emotion_cls_forward.1} parent=1 // loop_exit
      _
    %561 = vsyncpa [#allocation3], 1
    %s562 = scalar_lea.sflag [#allocation3], 1
    %563 = vsyncpa %s562, 1

</llo_original>
